<compile_context>
chip_gen: v6e
topology: v6e:2x2x1
jax: 0.10.0
libtpu: 0.0.40
codegen_flags: <defaults>
</compile_context>

<pallas_src>
import functools
import math

import jax
import jax.numpy as jnp
from jax import lax
from jax.experimental import pallas as pl
from jax.experimental.pallas import tpu as pltpu

NUM_IN = 32
HIDDEN = 128
NUM_INSTANCES = 32


def _attention_kernel(x_ref, w1_ref, b1_ref, w2_ref, o_ref, *,
                      num_instances, chunk_bags, n_chunks):
    """One grid step: scores + per-bag softmax for n_chunks * chunk_bags bags.

    x_ref : (bag_tile * num_instances, num_in)  low-precision activations
    w1_ref: (num_in, hidden)                    low-precision first-linear weight
    b1_ref: (1, hidden) f32                     first-linear bias
    w2_ref: (1, hidden) f32                     second-linear weight (row); b2 elided
    o_ref : (bag_tile, num_instances) f32       per-bag softmax weights
    """
    w1 = w1_ref[...]
    b1 = b1_ref[...]
    w2 = w2_ref[...]
    rows = chunk_bags * num_instances

    def chunk(c, carry):
        # Row-chunked so the tanh -> mul -> reduce chain stays within the vreg
        # file instead of spilling a full-tile (bt*ni, hidden) intermediate.
        r0 = pl.multiple_of(c * rows, rows)
        xc = x_ref[pl.ds(r0, rows), :]

        # Linear(num_in -> hidden) on the MXU (bf16 in, f32 accumulate), + bias, tanh.
        h = jnp.dot(xc, w1, preferred_element_type=jnp.float32) + b1
        h = jnp.tanh(h)                                          # (rows, hidden) f32

        # Linear(hidden -> 1) as VPU multiply + lane (XLU) reduction; b2 dropped
        # because softmax over the instance axis is invariant to a constant shift.
        s = jnp.sum(h.reshape(chunk_bags, num_instances, -1) * w2, axis=-1)

        # Softmax over the instance (lane) axis, all bags of the chunk in parallel.
        m = jnp.max(s, axis=-1, keepdims=True)
        e = jnp.exp(s - m)
        inv = 1.0 / jnp.sum(e, axis=-1, keepdims=True)           # exact; one per bag
        b0 = pl.multiple_of(c * chunk_bags, chunk_bags)
        o_ref[pl.ds(b0, chunk_bags), :] = (e * inv).astype(o_ref.dtype)
        return carry

    lax.fori_loop(0, n_chunks, chunk, 0, unroll=min(n_chunks, 4))


def _pick_tiles(bags, bag_tile, chunk_bags):
    """Pick bags-per-grid-step (bt) and bags-per-inner-chunk (cb)."""
    bt = min(bag_tile, bags)
    if bags >= 2 * chunk_bags:
        # At least two grid steps so the ("parallel",) axis can feed both v7x TCs.
        bt = min(bt, -(-bags // 2))
    if bt < bags:
        # Non-final tiles need 8-row-aligned output blocks: keep bt a multiple of
        # chunk_bags, preferring a divisor of bags (no ragged OOB-padded tail).
        bt = max((bt // chunk_bags) * chunk_bags, chunk_bags)
        for cand in range(bt, chunk_bags - 1, -chunk_bags):
            if bags % cand == 0:
                bt = cand
                break
    cb = math.gcd(chunk_bags, bt)
    return bt, cb


def attention_forward(x, w1, b1, w2, b2=None, *, num_instances=NUM_INSTANCES,
                      bag_tile=1024, chunk_bags=8, matmul_dtype=jnp.bfloat16):
    """x: (bags*num_instances, num_in) row-major. Returns (bags, num_instances, 1) f32."""
    total, num_in = x.shape
    assert total % num_instances == 0, "rows must be a multiple of num_instances"
    bags = total // num_instances
    hidden = w1.shape[1]

    bt, cb = _pick_tiles(bags, bag_tile, chunk_bags)
    n_chunks = bt // cb
    grid = (pl.cdiv(bags, bt),)

    # Low-precision operands for the x DMA / MXU matmul (halves HBM bytes of x,
    # single-pass bf16 MXU).  In production the caller should feed x already as
    # bf16 so the cast is not an extra HBM pass.
    x_lp = x.astype(matmul_dtype)
    w1_lp = w1.astype(matmul_dtype)
    b1_2d = b1.reshape(1, hidden).astype(jnp.float32)
    w2_row = w2.reshape(1, hidden).astype(jnp.float32)
    # b2 intentionally unused: softmax(s + c) == softmax(s) for a scalar c.
    del b2

    kernel = functools.partial(
        _attention_kernel,
        num_instances=num_instances, chunk_bags=cb, n_chunks=n_chunks)

    out2d = pl.pallas_call(
        kernel,
        out_shape=jax.ShapeDtypeStruct((bags, num_instances), jnp.float32),
        grid_spec=pltpu.PrefetchScalarGridSpec(
            num_scalar_prefetch=0,
            grid=grid,
            in_specs=[
                pl.BlockSpec((bt * num_instances, num_in), lambda b: (b, 0)),
                pl.BlockSpec((num_in, hidden), lambda b: (0, 0)),
                pl.BlockSpec((1, hidden), lambda b: (0, 0)),
                pl.BlockSpec((1, hidden), lambda b: (0, 0)),
            ],
            out_specs=pl.BlockSpec((bt, num_instances), lambda b: (b, 0)),
        ),
        compiler_params=pltpu.CompilerParams(
            dimension_semantics=("parallel",),
        ),
    )(x_lp, w1_lp, b1_2d, w2_row)

    return out2d.reshape(bags, num_instances, 1)


def reference_forward(x, w1, b1, w2, b2, num_instances=NUM_INSTANCES):
    out = jnp.tanh(x @ w1 + b1) @ w2 + b2
    out = out.reshape(-1, num_instances, 1)
    return jax.nn.softmax(out, axis=1)


if __name__ == "__main__":
    key = jax.random.PRNGKey(0)
    k_w1, k_b1, k_w2, k_b2, k_x = jax.random.split(key, 5)

    # Deterministic synthetic parameters (shapes from nn.Linear(32,128), nn.Linear(128,1)).
    w1 = jax.random.normal(k_w1, (NUM_IN, HIDDEN), dtype=jnp.float32) * 0.1
    b1 = jax.random.normal(k_b1, (HIDDEN,), dtype=jnp.float32) * 0.1
    w2 = jax.random.normal(k_w2, (HIDDEN, 1), dtype=jnp.float32) * 0.1
    b2 = jax.random.normal(k_b2, (1,), dtype=jnp.float32) * 0.1

    # Small configs: single-step, multi-grid-step, and non-multiple-of-8 bag counts.
    for i, bags in enumerate((8, 24, 10)):
        kx = jax.random.fold_in(k_x, i)
        x = jax.random.normal(kx, (bags * NUM_INSTANCES, NUM_IN), dtype=jnp.float32)

        out = attention_forward(x, w1, b1, w2, b2)
        out = jax.block_until_ready(out)

        ref = reference_forward(x, w1, b1, w2, b2)
        assert out.shape == (bags, NUM_INSTANCES, 1)
        # Tolerance absorbs the bf16 x / w1 matmul inputs (f32 accumulate).
        assert jnp.allclose(out, ref, atol=1e-2, rtol=1e-2), (
            bags, float(jnp.max(jnp.abs(out - ref))))

    print("KERNEL_OK")
</pallas_src>

<mosaic_0001>
module attributes {stable_mosaic.version = 11 : i64} {
  func.func @_attention_kernel(%arg0: i32, %arg1: memref<256x32xbf16, #tpu.memory_space<vmem>>, %arg2: memref<32x128xbf16, #tpu.memory_space<vmem>>, %arg3: memref<1x128xf32, #tpu.memory_space<vmem>>, %arg4: memref<1x128xf32, #tpu.memory_space<vmem>>, %arg5: memref<8x32xf32, #tpu.memory_space<vmem>>) attributes {dimension_semantics = [#tpu.dimension_semantics<parallel>], iteration_bounds = array<i64: 1>, scalar_prefetch = 0 : i64, scratch_operands = 0 : i64, tpu.core_type = #tpu.core_type<tc>, window_params = [{transform_indices = @transform_0, window_bounds = array<i64: 256, 32>}, {pipeline_mode = #tpu.pipeline_mode<synchronous>, transform_indices = @transform_1, window_bounds = array<i64: 32, 128>}, {pipeline_mode = #tpu.pipeline_mode<synchronous>, transform_indices = @transform_2, window_bounds = array<i64: 1, 128>}, {pipeline_mode = #tpu.pipeline_mode<synchronous>, transform_indices = @transform_3, window_bounds = array<i64: 1, 128>}, {transform_indices = @transform_4, window_bounds = array<i64: 8, 32>}]} {
    %c0 = arith.constant 0 : index
    %c0_0 = arith.constant 0 : index
    %0 = vector.load %arg2[%c0, %c0_0] : memref<32x128xbf16, #tpu.memory_space<vmem>>, vector<32x128xbf16>
    %c0_1 = arith.constant 0 : index
    %c0_2 = arith.constant 0 : index
    %1 = vector.load %arg3[%c0_1, %c0_2] : memref<1x128xf32, #tpu.memory_space<vmem>>, vector<1x128xf32>
    %c0_3 = arith.constant 0 : index
    %c0_4 = arith.constant 0 : index
    %2 = vector.load %arg4[%c0_3, %c0_4] : memref<1x128xf32, #tpu.memory_space<vmem>>, vector<1x128xf32>
    %c0_i32 = arith.constant 0 : i32
    %c256_i32 = arith.constant 256 : i32
    %3 = arith.muli %c0_i32, %c256_i32 : i32
    %4 = tpu.assume_multiple %3, 256 : i32
    %5 = arith.index_cast %4 : i32 to index
    %c0_5 = arith.constant 0 : index
    %6 = vector.load %arg1[%5, %c0_5] : memref<256x32xbf16, #tpu.memory_space<vmem>>, vector<256x32xbf16>
    %cst = arith.constant dense<0.000000e+00> : vector<256x128xf32>
    %7 = tpu.matmul %6, %0, %cst {dimension_numbers = #tpu.dot_dimension_numbers<[1], [0], [0], [1], [0, 0, 1, 1], [], []>} : vector<256x32xbf16>, vector<32x128xbf16>, vector<256x128xf32> -> vector<256x128xf32>
    %8 = vector.broadcast %1 : vector<1x128xf32> to vector<256x128xf32>
    %9 = arith.addf %7, %8 : vector<256x128xf32>
    %10 = math.tanh %9 : vector<256x128xf32>
    %11 = vector.shape_cast %10 : vector<256x128xf32> to vector<8x32x128xf32>
    %12 = vector.shape_cast %2 : vector<1x128xf32> to vector<1x1x128xf32>
    %13 = vector.broadcast %12 : vector<1x1x128xf32> to vector<8x32x128xf32>
    %14 = arith.mulf %11, %13 : vector<8x32x128xf32>
    %cst_6 = arith.constant dense<0.000000e+00> : vector<8x32xf32>
    %15 = vector.multi_reduction <add>, %14, %cst_6 [2] : vector<8x32x128xf32> to vector<8x32xf32>
    %cst_7 = arith.constant dense<0xFF800000> : vector<8xf32>
    %16 = vector.multi_reduction <maximumf>, %15, %cst_7 [1] : vector<8x32xf32> to vector<8xf32>
    %17 = vector.shape_cast %16 : vector<8xf32> to vector<8x1xf32>
    %18 = vector.broadcast %17 : vector<8x1xf32> to vector<8x32xf32>
    %19 = arith.subf %15, %18 : vector<8x32xf32>
    %20 = math.exp %19 : vector<8x32xf32>
    %cst_8 = arith.constant dense<0.000000e+00> : vector<8xf32>
    %21 = vector.multi_reduction <add>, %20, %cst_8 [1] : vector<8x32xf32> to vector<8xf32>
    %22 = vector.shape_cast %21 : vector<8xf32> to vector<8x1xf32>
    %cst_9 = arith.constant 1.000000e+00 : f32
    %23 = vector.broadcast %cst_9 : f32 to vector<8x1xf32>
    %24 = arith.divf %23, %22 : vector<8x1xf32>
    %c8_i32 = arith.constant 8 : i32
    %25 = arith.muli %c0_i32, %c8_i32 : i32
    %26 = tpu.assume_multiple %25, 8 : i32
    %27 = vector.broadcast %24 : vector<8x1xf32> to vector<8x32xf32>
    %28 = arith.mulf %20, %27 : vector<8x32xf32>
    %29 = arith.index_cast %26 : i32 to index
    %c0_10 = arith.constant 0 : index
    %30 = vector.load %arg5[%29, %c0_10] : memref<8x32xf32, #tpu.memory_space<vmem>>, vector<8x32xf32>
    tpu.vector_store %arg5[%29, %c0_10], %28 {strides = array<i32>} : memref<8x32xf32, #tpu.memory_space<vmem>>, vector<8x32xf32>,
    %c1_i32 = arith.constant 1 : i32
    return
  }
  func.func @transform_0(%arg0: i32) -> (i32, i32) {
    %c0_i32 = arith.constant 0 : i32
    %c0_i32_0 = arith.constant 0 : i32
    return %arg0, %c0_i32 : i32, i32
  }
  func.func @transform_1(%arg0: i32) -> (i32, i32) {
    %c0_i32 = arith.constant 0 : i32
    %c0_i32_0 = arith.constant 0 : i32
    %c0_i32_1 = arith.constant 0 : i32
    return %c0_i32, %c0_i32_0 : i32, i32
  }
  func.func @transform_2(%arg0: i32) -> (i32, i32) {
    %c0_i32 = arith.constant 0 : i32
    %c0_i32_0 = arith.constant 0 : i32
    %c0_i32_1 = arith.constant 0 : i32
    return %c0_i32, %c0_i32_0 : i32, i32
  }
  func.func @transform_3(%arg0: i32) -> (i32, i32) {
    %c0_i32 = arith.constant 0 : i32
    %c0_i32_0 = arith.constant 0 : i32
    %c0_i32_1 = arith.constant 0 : i32
    return %c0_i32, %c0_i32_0 : i32, i32
  }
  func.func @transform_4(%arg0: i32) -> (i32, i32) {
    %c0_i32 = arith.constant 0 : i32
    %c0_i32_0 = arith.constant 0 : i32
    return %arg0, %c0_i32 : i32, i32
  }
}

</mosaic_0001>

<llo_original>
// kernel: tpu_custom_call.1
$region0: #{tpu_custom_call.1}
  #allocation0 [shape = 'u32[]', space=smem, size = 0x4, offset = 0x4, fixed_abs, tag = 'smem constant byte address 0x4 - core index']
  #allocation1 [shape = 'u32[144,128]{1,0:T(1,128)}', space=vmem, size = 0x12000, scoped, tag = 'internal scratch']
  %s0 = inlined_call_operand.vmem [shape: bf16[256,32], index: 0, kind: input, shape index: {}]
  %s1 = inlined_call_operand.vmem [shape: bf16[32,128], index: 1, kind: input, shape index: {}]
  %s2 = inlined_call_operand.vmem [shape: f32[1,128], index: 2, kind: input, shape index: {}]
  %s3 = inlined_call_operand.vmem [shape: f32[1,128], index: 3, kind: input, shape index: {}]
  %s4 = inlined_call_operand.hbm [shape: f32[8,32], index: 4, kind: output, shape index: {}]
  %s5 = sld [smem:[#allocation0]]
  $region26: #{tpu_custom_call.1} parent=0
    _
  %s7 = ssub.s32 1, %s5
  %s8 = scalar_select 0, %s7, %s5
  $region1: #{tpu_custom_call.1} parent=0
    #allocation2 [shape = 'u8[4096]{0}', space=vmem, size = 0x1000, scoped, tag = 'output window, operand 0, single buffered']
    #allocation3 [shape = 's32[1]{0}', space=sflag, size = 0x4, scoped, tag = 'scoped memory for tpu_custom_call.1']
    %9 = vsyncpa [#allocation3], 0
    // Predicated region
    $region2: #{tpu_custom_call.1} parent=1 // pred_check
      _
    $region3: #{tpu_custom_call.1} parent=1 // pred_check_branch
      %11 = sbr.rel (0) target = $region5
    $region4: #{tpu_custom_call.1} parent=1 // pred_region
      _
    $region5: #{tpu_custom_call.1} parent=1 // pred_fallthru
      _
    // Predicated region
    $region6: #{tpu_custom_call.1} parent=1 // pred_check
      _
    $region7: #{tpu_custom_call.1} parent=1 // pred_check_branch
      %13 = sbr.rel (0) target = $region9
    $region8: #{tpu_custom_call.1} parent=1 // pred_region
      _
    $region9: #{tpu_custom_call.1} parent=1 // pred_fallthru
      _
    // Predicated region
    $region10: #{tpu_custom_call.1} parent=1 // pred_check
      _
    $region11: #{tpu_custom_call.1} parent=1 // pred_check_branch
      %15 = sbr.rel (0) target = $region13
    $region12: #{tpu_custom_call.1} parent=1 // pred_region
      _
    $region13: #{tpu_custom_call.1} parent=1 // pred_fallthru
      _
    // Predicated region
    $region14: #{tpu_custom_call.1} parent=1 // pred_check
      _
    $region15: #{tpu_custom_call.1} parent=1 // pred_check_branch
      %17 = sbr.rel (0) target = $region17
    $region16: #{tpu_custom_call.1} parent=1 // pred_region
      _
    $region17: #{tpu_custom_call.1} parent=1 // pred_fallthru
      _
    %v19 = vld [vmem:[%s1] sm:$0xf]
    %v20 = vld [vmem:[%s1 + $0x4] sm:$0xf]
    %v21 = vld [vmem:[%s1 + $0x8] sm:$0xf]
    %v22 = vld [vmem:[%s1 + $0xc] sm:$0xf]
    %v23 = vld [vmem:[%s2] sm:$0x1]
    %v24 = vld [vmem:[%s3] sm:$0x1]
    %v25 = vld [vmem:[%s0] sm:$0xf]
    %v26 = vld [vmem:[%s0 + $0x4] sm:$0xf]
    %v27 = vld [vmem:[%s0 + $0x8] sm:$0xf]
    %v28 = vld [vmem:[%s0 + $0xc] sm:$0xf]
    %v29 = vld [vmem:[%s0 + $0x10] sm:$0xf]
    %v30 = vld [vmem:[%s0 + $0x14] sm:$0xf]
    %v31 = vld [vmem:[%s0 + $0x18] sm:$0xf]
    %v32 = vld [vmem:[%s0 + $0x1c] sm:$0xf]
    %v33 = vld [vmem:[%s0 + $0x20] sm:$0xf]
    %v34 = vld [vmem:[%s0 + $0x24] sm:$0xf]
    %v35 = vld [vmem:[%s0 + $0x28] sm:$0xf]
    %v36 = vld [vmem:[%s0 + $0x2c] sm:$0xf]
    %v37 = vld [vmem:[%s0 + $0x30] sm:$0xf]
    %v38 = vld [vmem:[%s0 + $0x34] sm:$0xf]
    %v39 = vld [vmem:[%s0 + $0x38] sm:$0xf]
    %v40 = vld [vmem:[%s0 + $0x3c] sm:$0xf]
    %v41 = vld [vmem:[%s0 + $0x40] sm:$0xf]
    %v42 = vld [vmem:[%s0 + $0x44] sm:$0xf]
    %v43 = vld [vmem:[%s0 + $0x48] sm:$0xf]
    %v44 = vld [vmem:[%s0 + $0x4c] sm:$0xf]
    %v45 = vld [vmem:[%s0 + $0x50] sm:$0xf]
    %v46 = vld [vmem:[%s0 + $0x54] sm:$0xf]
    %v47 = vld [vmem:[%s0 + $0x58] sm:$0xf]
    %v48 = vld [vmem:[%s0 + $0x5c] sm:$0xf]
    %v49 = vld [vmem:[%s0 + $0x60] sm:$0xf]
    %v50 = vld [vmem:[%s0 + $0x64] sm:$0xf]
    %v51 = vld [vmem:[%s0 + $0x68] sm:$0xf]
    %v52 = vld [vmem:[%s0 + $0x6c] sm:$0xf]
    %v53 = vld [vmem:[%s0 + $0x70] sm:$0xf]
    %v54 = vld [vmem:[%s0 + $0x74] sm:$0xf]
    %v55 = vld [vmem:[%s0 + $0x78] sm:$0xf]
    %v56 = vld [vmem:[%s0 + $0x7c] sm:$0xf]
    %v58 = vlaneseq
    %v59 = vshrl.u32 %v58, 7
    %v60 = vsub.s32 0, %v59
    %v61 = vrot.slane %v23, %v60
    %v95 = vunpack.c.l.b16 %v25
    %v96 = vunpack.c.l.b16 %v26
    %v97 = vunpack.c.l.b16 %v27
    %v98 = vunpack.c.l.b16 %v28
    %v99 = vunpack.c.l.b16 %v29
    %v100 = vunpack.c.l.b16 %v30
    %v101 = vunpack.c.l.b16 %v31
    %v102 = vunpack.c.l.b16 %v32
    %v103 = vunpack.c.l.b16 %v33
    %v104 = vunpack.c.l.b16 %v34
    %v105 = vunpack.c.l.b16 %v35
    %v106 = vunpack.c.l.b16 %v36
    %v107 = vunpack.c.l.b16 %v37
    %v108 = vunpack.c.l.b16 %v38
    %v109 = vunpack.c.l.b16 %v39
    %v110 = vunpack.c.l.b16 %v40
    %v111 = vunpack.c.l.b16 %v41
    %v112 = vunpack.c.l.b16 %v42
    %v113 = vunpack.c.l.b16 %v43
    %v114 = vunpack.c.l.b16 %v44
    %v115 = vunpack.c.l.b16 %v45
    %v116 = vunpack.c.l.b16 %v46
    %v117 = vunpack.c.l.b16 %v47
    %v118 = vunpack.c.l.b16 %v48
    %v119 = vunpack.c.l.b16 %v49
    %v120 = vunpack.c.l.b16 %v50
    %v121 = vunpack.c.l.b16 %v51
    %v122 = vunpack.c.l.b16 %v52
    %v123 = vunpack.c.l.b16 %v53
    %v124 = vunpack.c.l.b16 %v54
    %v125 = vunpack.c.l.b16 %v55
    %v126 = vunpack.c.l.b16 %v56
    %v127 = vpack.c.b16 %v96, %v95
    %v128 = vpack.c.b16 %v98, %v97
    %v129 = vpack.c.b16 %v100, %v99
    %v130 = vpack.c.b16 %v102, %v101
    %v131 = vpack.c.b16 %v104, %v103
    %v132 = vpack.c.b16 %v106, %v105
    %v133 = vpack.c.b16 %v108, %v107
    %v134 = vpack.c.b16 %v110, %v109
    %v135 = vpack.c.b16 %v112, %v111
    %v136 = vpack.c.b16 %v114, %v113
    %v137 = vpack.c.b16 %v116, %v115
    %v138 = vpack.c.b16 %v118, %v117
    %v139 = vpack.c.b16 %v120, %v119
    %v140 = vpack.c.b16 %v122, %v121
    %v141 = vpack.c.b16 %v124, %v123
    %v142 = vpack.c.b16 %v126, %v125
    %v147 = vunpack.c.l.b16 %v19
    %v148 = vunpack.c.l.b16 %v20
    %v149 = vunpack.c.l.b16 %v21
    %v150 = vunpack.c.l.b16 %v22
    %v151 = vpack.c.b16 %v148, %v147
    %v152 = vpack.c.b16 %v150, %v149
    %vm155 = vcmask 261120
    %v157 = vsel %vm155, %v127, 0
    %v160 = vsel %vm155, %v128, 0
    %v163 = vsel %vm155, %v129, 0
    %v166 = vsel %vm155, %v130, 0
    %v169 = vsel %vm155, %v131, 0
    %v172 = vsel %vm155, %v132, 0
    %v175 = vsel %vm155, %v133, 0
    %v178 = vsel %vm155, %v134, 0
    %v181 = vsel %vm155, %v135, 0
    %v184 = vsel %vm155, %v136, 0
    %v187 = vsel %vm155, %v137, 0
    %v190 = vsel %vm155, %v138, 0
    %v193 = vsel %vm155, %v139, 0
    %v196 = vsel %vm155, %v140, 0
    %v199 = vsel %vm155, %v141, 0
    %v202 = vsel %vm155, %v142, 0
    %204 = vmatprep.subr.bf16.mxu0 0
    %205 = vmatpush1.bf16.msra.mxu0 0
    %206 = vmatprep.subr.bf16.mxu0 0
    %207 = vmatpush1.bf16.msra.mxu0 0
    %208 = vmatprep.subr.bf16.mxu0 0
    %209 = vmatpush1.bf16.msra.mxu0 0
    %210 = vmatprep.subr.bf16.mxu0 0
    %211 = vmatpush1.bf16.msra.mxu0 0
    %212 = vmatprep.subr.bf16.mxu0 0
    %213 = vmatpush1.bf16.msra.mxu0 0
    %214 = vmatprep.subr.bf16.mxu0 0
    %215 = vmatpush1.bf16.msra.mxu0 0
    %216 = vmatprep.subr.bf16.mxu0 0
    %217 = vmatpush1.bf16.msra.mxu0 %v152
    %218 = vmatprep.subr.bf16.mxu0 0
    %219 = vmatpush1.bf16.msra.mxu0 %v151
    %220 = vmatprep.subr.bf16.mxu0 0
    %221 = vmatpush2.bf16.msra.mxu0 0
    %222 = vmatprep.subr.bf16.mxu0 0
    %223 = vmatpush2.bf16.msra.mxu0 0
    %224 = vmatprep.subr.bf16.mxu0 0
    %225 = vmatpush2.bf16.msra.mxu0 0
    %226 = vmatprep.subr.bf16.mxu0 0
    %227 = vmatpush2.bf16.msra.mxu0 0
    %228 = vmatprep.subr.bf16.mxu0 0
    %229 = vmatpush2.bf16.msra.mxu0 0
    %230 = vmatprep.subr.bf16.mxu0 0
    %231 = vmatpush2.bf16.msra.mxu0 0
    %232 = vmatprep.subr.bf16.mxu0 0
    %233 = vmatpush2.bf16.msra.mxu0 0
    %234 = vmatprep.subr.bf16.mxu0 0
    %235 = vmatpush2.bf16.msra.mxu0 0
    %236 = vmatprep.mubr.bf16.mxu0 0
    %237 = vmatmul.mubr.bf16.gmra.mxu0 %v157
    %v238 = vpop.f32.mrf.mxu0
    %v239 = vadd.f32 %v61, %v238
    %v240 = vpop.f32.mrf.mxu0
    %v241 = vpop.f32.mrf.mxu0
    %v242 = vadd.f32 %v61, %v241
    %v243 = vpop.f32.mrf.mxu0
    %244 = vmatprep.mubr.bf16.mxu0 0
    %245 = vmatmul.mubr.bf16.gmra.mxu0 %v160
    %v246 = vpop.f32.mrf.mxu0
    %v247 = vadd.f32 %v61, %v246
    %v248 = vpop.f32.mrf.mxu0
    %v249 = vpop.f32.mrf.mxu0
    %v250 = vadd.f32 %v61, %v249
    %v251 = vpop.f32.mrf.mxu0
    %252 = vmatprep.mubr.bf16.mxu0 0
    %253 = vmatmul.mubr.bf16.gmra.mxu0 %v163
    %v254 = vpop.f32.mrf.mxu0
    %v255 = vadd.f32 %v61, %v254
    %v256 = vpop.f32.mrf.mxu0
    %v257 = vpop.f32.mrf.mxu0
    %v258 = vadd.f32 %v61, %v257
    %v259 = vpop.f32.mrf.mxu0
    %260 = vmatprep.mubr.bf16.mxu0 0
    %261 = vmatmul.mubr.bf16.gmra.mxu0 %v166
    %v262 = vpop.f32.mrf.mxu0
    %v263 = vadd.f32 %v61, %v262
    %v264 = vpop.f32.mrf.mxu0
    %v265 = vpop.f32.mrf.mxu0
    %v266 = vadd.f32 %v61, %v265
    %v267 = vpop.f32.mrf.mxu0
    %268 = vmatprep.mubr.bf16.mxu0 0
    %269 = vmatmul.mubr.bf16.gmra.mxu0 %v169
    %v270 = vpop.f32.mrf.mxu0
    %v271 = vadd.f32 %v61, %v270
    %v272 = vpop.f32.mrf.mxu0
    %v273 = vpop.f32.mrf.mxu0
    %v274 = vadd.f32 %v61, %v273
    %v275 = vpop.f32.mrf.mxu0
    %276 = vmatprep.mubr.bf16.mxu0 0
    %277 = vmatmul.mubr.bf16.gmra.mxu0 %v172
    %v278 = vpop.f32.mrf.mxu0
    %v279 = vadd.f32 %v61, %v278
    %v280 = vpop.f32.mrf.mxu0
    %v281 = vpop.f32.mrf.mxu0
    %v282 = vadd.f32 %v61, %v281
    %v283 = vpop.f32.mrf.mxu0
    %284 = vmatprep.mubr.bf16.mxu0 0
    %285 = vmatmul.mubr.bf16.gmra.mxu0 %v175
    %v286 = vpop.f32.mrf.mxu0
    %v287 = vadd.f32 %v61, %v286
    %v288 = vpop.f32.mrf.mxu0
    %v289 = vpop.f32.mrf.mxu0
    %v290 = vadd.f32 %v61, %v289
    %v291 = vpop.f32.mrf.mxu0
    %292 = vmatprep.mubr.bf16.mxu0 0
    %293 = vmatmul.mubr.bf16.gmra.mxu0 %v178
    %v294 = vpop.f32.mrf.mxu0
    %v295 = vadd.f32 %v61, %v294
    %v296 = vpop.f32.mrf.mxu0
    %v297 = vpop.f32.mrf.mxu0
    %v298 = vadd.f32 %v61, %v297
    %v299 = vpop.f32.mrf.mxu0
    %300 = vmatprep.mubr.bf16.mxu0 0
    %301 = vmatmul.mubr.bf16.gmra.mxu0 %v181
    %v302 = vpop.f32.mrf.mxu0
    %v303 = vadd.f32 %v61, %v302
    %v304 = vpop.f32.mrf.mxu0
    %v305 = vpop.f32.mrf.mxu0
    %v306 = vadd.f32 %v61, %v305
    %v307 = vpop.f32.mrf.mxu0
    %308 = vmatprep.mubr.bf16.mxu0 0
    %309 = vmatmul.mubr.bf16.gmra.mxu0 %v184
    %v310 = vpop.f32.mrf.mxu0
    %v311 = vadd.f32 %v61, %v310
    %v312 = vpop.f32.mrf.mxu0
    %v313 = vpop.f32.mrf.mxu0
    %v314 = vadd.f32 %v61, %v313
    %v315 = vpop.f32.mrf.mxu0
    %316 = vmatprep.mubr.bf16.mxu0 0
    %317 = vmatmul.mubr.bf16.gmra.mxu0 %v187
    %v318 = vpop.f32.mrf.mxu0
    %v319 = vadd.f32 %v61, %v318
    %v320 = vpop.f32.mrf.mxu0
    %v321 = vpop.f32.mrf.mxu0
    %v322 = vadd.f32 %v61, %v321
    %v323 = vpop.f32.mrf.mxu0
    %324 = vmatprep.mubr.bf16.mxu0 0
    %325 = vmatmul.mubr.bf16.gmra.mxu0 %v190
    %v326 = vpop.f32.mrf.mxu0
    %v327 = vadd.f32 %v61, %v326
    %v328 = vpop.f32.mrf.mxu0
    %v329 = vpop.f32.mrf.mxu0
    %v330 = vadd.f32 %v61, %v329
    %v331 = vpop.f32.mrf.mxu0
    %332 = vmatprep.mubr.bf16.mxu0 0
    %333 = vmatmul.mubr.bf16.gmra.mxu0 %v193
    %v334 = vpop.f32.mrf.mxu0
    %v335 = vadd.f32 %v61, %v334
    %v336 = vpop.f32.mrf.mxu0
    %v337 = vpop.f32.mrf.mxu0
    %v338 = vadd.f32 %v61, %v337
    %v339 = vpop.f32.mrf.mxu0
    %340 = vmatprep.mubr.bf16.mxu0 0
    %341 = vmatmul.mubr.bf16.gmra.mxu0 %v196
    %v342 = vpop.f32.mrf.mxu0
    %v343 = vadd.f32 %v61, %v342
    %v344 = vpop.f32.mrf.mxu0
    %v345 = vpop.f32.mrf.mxu0
    %v346 = vadd.f32 %v61, %v345
    %v347 = vpop.f32.mrf.mxu0
    %348 = vmatprep.mubr.bf16.mxu0 0
    %349 = vmatmul.mubr.bf16.gmra.mxu0 %v199
    %v350 = vpop.f32.mrf.mxu0
    %v351 = vadd.f32 %v61, %v350
    %v352 = vpop.f32.mrf.mxu0
    %v353 = vpop.f32.mrf.mxu0
    %v354 = vadd.f32 %v61, %v353
    %v355 = vpop.f32.mrf.mxu0
    %356 = vmatprep.mubr.bf16.mxu0 0
    %357 = vmatmul.mubr.bf16.gmra.mxu0 %v202
    %v358 = vpop.f32.mrf.mxu0
    %v359 = vadd.f32 %v61, %v358
    %v360 = vpop.f32.mrf.mxu0
    %v361 = vpop.f32.mrf.mxu0
    %v362 = vadd.f32 %v61, %v361
    %v363 = vpop.f32.mrf.mxu0
    %364 = vdwg.mxu0
    %v365 = vtanh.pop %v239
    %v366 = vtanh.pop %v242
    %v367 = vtanh.pop %v247
    %v368 = vtanh.pop %v250
    %v369 = vtanh.pop %v255
    %v370 = vtanh.pop %v258
    %v371 = vtanh.pop %v263
    %v372 = vtanh.pop %v266
    %v373 = vtanh.pop %v271
    %v374 = vtanh.pop %v274
    %v375 = vtanh.pop %v279
    %v376 = vtanh.pop %v282
    %v377 = vtanh.pop %v287
    %v378 = vtanh.pop %v290
    %v379 = vtanh.pop %v295
    %v380 = vtanh.pop %v298
    %v381 = vtanh.pop %v303
    %v382 = vtanh.pop %v306
    %v383 = vtanh.pop %v311
    %v384 = vtanh.pop %v314
    %v385 = vtanh.pop %v319
    %v386 = vtanh.pop %v322
    %v387 = vtanh.pop %v327
    %v388 = vtanh.pop %v330
    %v389 = vtanh.pop %v335
    %v390 = vtanh.pop %v338
    %v391 = vtanh.pop %v343
    %v392 = vtanh.pop %v346
    %v393 = vtanh.pop %v351
    %v394 = vtanh.pop %v354
    %v395 = vtanh.pop %v359
    %v396 = vtanh.pop %v362
    %v398 = vlaneseq
    %v399 = vshrl.u32 %v398, 7
    %v400 = vsub.s32 0, %v399
    %v401 = vrot.slane %v24, %v400
    %v403 = vmul.f32 %v365, %v401
    %v404 = vmul.f32 %v366, %v401
    %v405 = vmul.f32 %v367, %v401
    %v406 = vmul.f32 %v368, %v401
    %v407 = vmul.f32 %v369, %v401
    %v408 = vmul.f32 %v370, %v401
    %v409 = vmul.f32 %v371, %v401
    %v410 = vmul.f32 %v372, %v401
    %v411 = vmul.f32 %v373, %v401
    %v412 = vmul.f32 %v374, %v401
    %v413 = vmul.f32 %v375, %v401
    %v414 = vmul.f32 %v376, %v401
    %v415 = vmul.f32 %v377, %v401
    %v416 = vmul.f32 %v378, %v401
    %v417 = vmul.f32 %v379, %v401
    %v418 = vmul.f32 %v380, %v401
    %v419 = vmul.f32 %v381, %v401
    %v420 = vmul.f32 %v382, %v401
    %v421 = vmul.f32 %v383, %v401
    %v422 = vmul.f32 %v384, %v401
    %v423 = vmul.f32 %v385, %v401
    %v424 = vmul.f32 %v386, %v401
    %v425 = vmul.f32 %v387, %v401
    %v426 = vmul.f32 %v388, %v401
    %v427 = vmul.f32 %v389, %v401
    %v428 = vmul.f32 %v390, %v401
    %v429 = vmul.f32 %v391, %v401
    %v430 = vmul.f32 %v392, %v401
    %v431 = vmul.f32 %v393, %v401
    %v432 = vmul.f32 %v394, %v401
    %v433 = vmul.f32 %v395, %v401
    %v434 = vmul.f32 %v396, %v401
    %435 = vadd.xlane.f32.xlu0 %v403
    %v436 = vpop.xlane.xlu0 %435
    %437 = vadd.xlane.f32.xlu0 %v404
    %v438 = vpop.xlane.xlu0 %437
    %439 = vadd.xlane.f32.xlu0 %v405
    %v440 = vpop.xlane.xlu0 %439
    %441 = vadd.xlane.f32.xlu0 %v406
    %v442 = vpop.xlane.xlu0 %441
    %443 = vadd.xlane.f32.xlu0 %v407
    %v444 = vpop.xlane.xlu0 %443
    %445 = vadd.xlane.f32.xlu0 %v408
    %v446 = vpop.xlane.xlu0 %445
    %447 = vadd.xlane.f32.xlu0 %v409
    %v448 = vpop.xlane.xlu0 %447
    %449 = vadd.xlane.f32.xlu0 %v410
    %v450 = vpop.xlane.xlu0 %449
    %451 = vadd.xlane.f32.xlu0 %v411
    %v452 = vpop.xlane.xlu0 %451
    %453 = vadd.xlane.f32.xlu0 %v412
    %v454 = vpop.xlane.xlu0 %453
    %455 = vadd.xlane.f32.xlu0 %v413
    %v456 = vpop.xlane.xlu0 %455
    %457 = vadd.xlane.f32.xlu0 %v414
    %v458 = vpop.xlane.xlu0 %457
    %459 = vadd.xlane.f32.xlu0 %v415
    %v460 = vpop.xlane.xlu0 %459
    %461 = vadd.xlane.f32.xlu0 %v416
    %v462 = vpop.xlane.xlu0 %461
    %463 = vadd.xlane.f32.xlu0 %v417
    %v464 = vpop.xlane.xlu0 %463
    %465 = vadd.xlane.f32.xlu0 %v418
    %v466 = vpop.xlane.xlu0 %465
    %467 = vadd.xlane.f32.xlu0 %v419
    %v468 = vpop.xlane.xlu0 %467
    %469 = vadd.xlane.f32.xlu0 %v420
    %v470 = vpop.xlane.xlu0 %469
    %471 = vadd.xlane.f32.xlu0 %v421
    %v472 = vpop.xlane.xlu0 %471
    %473 = vadd.xlane.f32.xlu0 %v422
    %v474 = vpop.xlane.xlu0 %473
    %475 = vadd.xlane.f32.xlu0 %v423
    %v476 = vpop.xlane.xlu0 %475
    %477 = vadd.xlane.f32.xlu0 %v424
    %v478 = vpop.xlane.xlu0 %477
    %479 = vadd.xlane.f32.xlu0 %v425
    %v480 = vpop.xlane.xlu0 %479
    %481 = vadd.xlane.f32.xlu0 %v426
    %v482 = vpop.xlane.xlu0 %481
    %483 = vadd.xlane.f32.xlu0 %v427
    %v484 = vpop.xlane.xlu0 %483
    %485 = vadd.xlane.f32.xlu0 %v428
    %v486 = vpop.xlane.xlu0 %485
    %487 = vadd.xlane.f32.xlu0 %v429
    %v488 = vpop.xlane.xlu0 %487
    %489 = vadd.xlane.f32.xlu0 %v430
    %v490 = vpop.xlane.xlu0 %489
    %491 = vadd.xlane.f32.xlu0 %v431
    %v492 = vpop.xlane.xlu0 %491
    %493 = vadd.xlane.f32.xlu0 %v432
    %v494 = vpop.xlane.xlu0 %493
    %495 = vadd.xlane.f32.xlu0 %v433
    %v496 = vpop.xlane.xlu0 %495
    %497 = vadd.xlane.f32.xlu0 %v434
    %v498 = vpop.xlane.xlu0 %497
    %v531 = vlaneseq
    %v532 = vand.u32 %v531, 127
    %v533 = vlaneseq
    %v534 = vshrl.u32 %v533, 7
    %v535 = vsub.s32 %v532, %v534
    %v536 = vrot.slane %v436, %v535
    %v537 = vadd.s32 %v532, 4294967288
    %v538 = vlaneseq
    %v539 = vshrl.u32 %v538, 7
    %v540 = vsub.s32 %v537, %v539
    %v541 = vrot.slane %v438, %v540
    %vm542 = vcmask 130112
    %v543 = vsel %vm542, %v541, %v536
    %v544 = vadd.s32 %v532, 4294967280
    %v545 = vlaneseq
    %v546 = vshrl.u32 %v545, 7
    %v547 = vsub.s32 %v544, %v546
    %v548 = vrot.slane %v440, %v547
    %vm549 = vcmask 195712
    %v550 = vsel %vm549, %v548, %v543
    %v551 = vadd.s32 %v532, 4294967272
    %v552 = vlaneseq
    %v553 = vshrl.u32 %v552, 7
    %v554 = vsub.s32 %v551, %v553
    %v555 = vrot.slane %v442, %v554
    %vm556 = vcmask 261312
    %v557 = vsel %vm556, %v555, %v550
    %v558 = vlaneseq
    %v559 = vshrl.u32 %v558, 7
    %v560 = vsub.s32 %v532, %v559
    %v561 = vrot.slane %v444, %v560
    %v562 = vlaneseq
    %v563 = vshrl.u32 %v562, 7
    %v564 = vsub.s32 %v537, %v563
    %v565 = vrot.slane %v446, %v564
    %v566 = vsel %vm542, %v565, %v561
    %v567 = vlaneseq
    %v568 = vshrl.u32 %v567, 7
    %v569 = vsub.s32 %v544, %v568
    %v570 = vrot.slane %v448, %v569
    %v571 = vsel %vm549, %v570, %v566
    %v572 = vlaneseq
    %v573 = vshrl.u32 %v572, 7
    %v574 = vsub.s32 %v551, %v573
    %v575 = vrot.slane %v450, %v574
    %v576 = vsel %vm556, %v575, %v571
    %v577 = vlaneseq
    %v578 = vshrl.u32 %v577, 7
    %v579 = vsub.s32 %v532, %v578
    %v580 = vrot.slane %v452, %v579
    %v581 = vlaneseq
    %v582 = vshrl.u32 %v581, 7
    %v583 = vsub.s32 %v537, %v582
    %v584 = vrot.slane %v454, %v583
    %v585 = vsel %vm542, %v584, %v580
    %v586 = vlaneseq
    %v587 = vshrl.u32 %v586, 7
    %v588 = vsub.s32 %v544, %v587
    %v589 = vrot.slane %v456, %v588
    %v590 = vsel %vm549, %v589, %v585
    %v591 = vlaneseq
    %v592 = vshrl.u32 %v591, 7
    %v593 = vsub.s32 %v551, %v592
    %v594 = vrot.slane %v458, %v593
    %v595 = vsel %vm556, %v594, %v590
    %v596 = vlaneseq
    %v597 = vshrl.u32 %v596, 7
    %v598 = vsub.s32 %v532, %v597
    %v599 = vrot.slane %v460, %v598
    %v600 = vlaneseq
    %v601 = vshrl.u32 %v600, 7
    %v602 = vsub.s32 %v537, %v601
    %v603 = vrot.slane %v462, %v602
    %v604 = vsel %vm542, %v603, %v599
    %v605 = vlaneseq
    %v606 = vshrl.u32 %v605, 7
    %v607 = vsub.s32 %v544, %v606
    %v608 = vrot.slane %v464, %v607
    %v609 = vsel %vm549, %v608, %v604
    %v610 = vlaneseq
    %v611 = vshrl.u32 %v610, 7
    %v612 = vsub.s32 %v551, %v611
    %v613 = vrot.slane %v466, %v612
    %v614 = vsel %vm556, %v613, %v609
    %v615 = vlaneseq
    %v616 = vshrl.u32 %v615, 7
    %v617 = vsub.s32 %v532, %v616
    %v618 = vrot.slane %v468, %v617
    %v619 = vlaneseq
    %v620 = vshrl.u32 %v619, 7
    %v621 = vsub.s32 %v537, %v620
    %v622 = vrot.slane %v470, %v621
    %v623 = vsel %vm542, %v622, %v618
    %v624 = vlaneseq
    %v625 = vshrl.u32 %v624, 7
    %v626 = vsub.s32 %v544, %v625
    %v627 = vrot.slane %v472, %v626
    %v628 = vsel %vm549, %v627, %v623
    %v629 = vlaneseq
    %v630 = vshrl.u32 %v629, 7
    %v631 = vsub.s32 %v551, %v630
    %v632 = vrot.slane %v474, %v631
    %v633 = vsel %vm556, %v632, %v628
    %v634 = vlaneseq
    %v635 = vshrl.u32 %v634, 7
    %v636 = vsub.s32 %v532, %v635
    %v637 = vrot.slane %v476, %v636
    %v638 = vlaneseq
    %v639 = vshrl.u32 %v638, 7
    %v640 = vsub.s32 %v537, %v639
    %v641 = vrot.slane %v478, %v640
    %v642 = vsel %vm542, %v641, %v637
    %v643 = vlaneseq
    %v644 = vshrl.u32 %v643, 7
    %v645 = vsub.s32 %v544, %v644
    %v646 = vrot.slane %v480, %v645
    %v647 = vsel %vm549, %v646, %v642
    %v648 = vlaneseq
    %v649 = vshrl.u32 %v648, 7
    %v650 = vsub.s32 %v551, %v649
    %v651 = vrot.slane %v482, %v650
    %v652 = vsel %vm556, %v651, %v647
    %v653 = vlaneseq
    %v654 = vshrl.u32 %v653, 7
    %v655 = vsub.s32 %v532, %v654
    %v656 = vrot.slane %v484, %v655
    %v657 = vlaneseq
    %v658 = vshrl.u32 %v657, 7
    %v659 = vsub.s32 %v537, %v658
    %v660 = vrot.slane %v486, %v659
    %v661 = vsel %vm542, %v660, %v656
    %v662 = vlaneseq
    %v663 = vshrl.u32 %v662, 7
    %v664 = vsub.s32 %v544, %v663
    %v665 = vrot.slane %v488, %v664
    %v666 = vsel %vm549, %v665, %v661
    %v667 = vlaneseq
    %v668 = vshrl.u32 %v667, 7
    %v669 = vsub.s32 %v551, %v668
    %v670 = vrot.slane %v490, %v669
    %v671 = vsel %vm556, %v670, %v666
    %v672 = vlaneseq
    %v673 = vshrl.u32 %v672, 7
    %v674 = vsub.s32 %v532, %v673
    %v675 = vrot.slane %v492, %v674
    %v676 = vlaneseq
    %v677 = vshrl.u32 %v676, 7
    %v678 = vsub.s32 %v537, %v677
    %v679 = vrot.slane %v494, %v678
    %v680 = vsel %vm542, %v679, %v675
    %v681 = vlaneseq
    %v682 = vshrl.u32 %v681, 7
    %v683 = vsub.s32 %v544, %v682
    %v684 = vrot.slane %v496, %v683
    %v685 = vsel %vm549, %v684, %v680
    %v686 = vlaneseq
    %v687 = vshrl.u32 %v686, 7
    %v688 = vsub.s32 %v551, %v687
    %v689 = vrot.slane %v498, %v688
    %v690 = vsel %vm556, %v689, %v685
    %vm691 = vcmask 1041409
    %v692 = vsel %vm691, %v576, %v557
    %vm693 = vcmask 1042434
    %v694 = vsel %vm693, %v595, %v692
    %vm695 = vcmask 1043459
    %v696 = vsel %vm695, %v614, %v694
    %vm697 = vcmask 1044484
    %v698 = vsel %vm697, %v633, %v696
    %vm699 = vcmask 1045509
    %v700 = vsel %vm699, %v652, %v698
    %vm701 = vcmask 1046534
    %v702 = vsel %vm701, %v671, %v700
    %vm703 = vcmask 1047559
    %v704 = vsel %vm703, %v690, %v702
    %v706 = vsel %vm155, %v704, -inf
    %707 = vmax.xlane.f32.xlu0 %v706
    %v708 = vpop.xlane.xlu0 %707
    %v710 = vlaneseq
    %v711 = vshrl.u32 %v710, 7
    %v712 = vsub.s32 0, %v711
    %v713 = vrot.slane %v708, %v712
    %v714 = vlaneseq
    %v715 = vshrl.u32 %v714, 7
    %v716 = vsub.s32 1, %v715
    %v717 = vrot.slane %v708, %v716
    %v718 = vlaneseq
    %v719 = vshrl.u32 %v718, 7
    %v720 = vsub.s32 2, %v719
    %v721 = vrot.slane %v708, %v720
    %v722 = vlaneseq
    %v723 = vshrl.u32 %v722, 7
    %v724 = vsub.s32 3, %v723
    %v725 = vrot.slane %v708, %v724
    %v726 = vlaneseq
    %v727 = vshrl.u32 %v726, 7
    %v728 = vsub.s32 4, %v727
    %v729 = vrot.slane %v708, %v728
    %v730 = vlaneseq
    %v731 = vshrl.u32 %v730, 7
    %v732 = vsub.s32 5, %v731
    %v733 = vrot.slane %v708, %v732
    %v734 = vlaneseq
    %v735 = vshrl.u32 %v734, 7
    %v736 = vsub.s32 6, %v735
    %v737 = vrot.slane %v708, %v736
    %v738 = vlaneseq
    %v739 = vshrl.u32 %v738, 7
    %v740 = vsub.s32 7, %v739
    %v741 = vrot.slane %v708, %v740
    %v750 = vsub.f32 %v436, %v713
    %v751 = vsub.f32 %v438, %v713
    %v752 = vsub.f32 %v440, %v713
    %v753 = vsub.f32 %v442, %v713
    %v754 = vsub.f32 %v444, %v717
    %v755 = vsub.f32 %v446, %v717
    %v756 = vsub.f32 %v448, %v717
    %v757 = vsub.f32 %v450, %v717
    %v758 = vsub.f32 %v452, %v721
    %v759 = vsub.f32 %v454, %v721
    %v760 = vsub.f32 %v456, %v721
    %v761 = vsub.f32 %v458, %v721
    %v762 = vsub.f32 %v460, %v725
    %v763 = vsub.f32 %v462, %v725
    %v764 = vsub.f32 %v464, %v725
    %v765 = vsub.f32 %v466, %v725
    %v766 = vsub.f32 %v468, %v729
    %v767 = vsub.f32 %v470, %v729
    %v768 = vsub.f32 %v472, %v729
    %v769 = vsub.f32 %v474, %v729
    %v770 = vsub.f32 %v476, %v733
    %v771 = vsub.f32 %v478, %v733
    %v772 = vsub.f32 %v480, %v733
    %v773 = vsub.f32 %v482, %v733
    %v774 = vsub.f32 %v484, %v737
    %v775 = vsub.f32 %v486, %v737
    %v776 = vsub.f32 %v488, %v737
    %v777 = vsub.f32 %v490, %v737
    %v778 = vsub.f32 %v492, %v741
    %v779 = vsub.f32 %v494, %v741
    %v780 = vsub.f32 %v496, %v741
    %v781 = vsub.f32 %v498, %v741
    %v782 = vmul.f32 %v750, 1.442695
    %v783 = vpow.pop %v782
    %v784 = vmul.f32 %v751, 1.442695
    %v785 = vpow.pop %v784
    %v786 = vmul.f32 %v752, 1.442695
    %v787 = vpow.pop %v786
    %v788 = vmul.f32 %v753, 1.442695
    %v789 = vpow.pop %v788
    %v790 = vmul.f32 %v754, 1.442695
    %v791 = vpow.pop %v790
    %v792 = vmul.f32 %v755, 1.442695
    %v793 = vpow.pop %v792
    %v794 = vmul.f32 %v756, 1.442695
    %v795 = vpow.pop %v794
    %v796 = vmul.f32 %v757, 1.442695
    %v797 = vpow.pop %v796
    %v798 = vmul.f32 %v758, 1.442695
    %v799 = vpow.pop %v798
    %v800 = vmul.f32 %v759, 1.442695
    %v801 = vpow.pop %v800
    %v802 = vmul.f32 %v760, 1.442695
    %v803 = vpow.pop %v802
    %v804 = vmul.f32 %v761, 1.442695
    %v805 = vpow.pop %v804
    %v806 = vmul.f32 %v762, 1.442695
    %v807 = vpow.pop %v806
    %v808 = vmul.f32 %v763, 1.442695
    %v809 = vpow.pop %v808
    %v810 = vmul.f32 %v764, 1.442695
    %v811 = vpow.pop %v810
    %v812 = vmul.f32 %v765, 1.442695
    %v813 = vpow.pop %v812
    %v814 = vmul.f32 %v766, 1.442695
    %v815 = vpow.pop %v814
    %v816 = vmul.f32 %v767, 1.442695
    %v817 = vpow.pop %v816
    %v818 = vmul.f32 %v768, 1.442695
    %v819 = vpow.pop %v818
    %v820 = vmul.f32 %v769, 1.442695
    %v821 = vpow.pop %v820
    %v822 = vmul.f32 %v770, 1.442695
    %v823 = vpow.pop %v822
    %v824 = vmul.f32 %v771, 1.442695
    %v825 = vpow.pop %v824
    %v826 = vmul.f32 %v772, 1.442695
    %v827 = vpow.pop %v826
    %v828 = vmul.f32 %v773, 1.442695
    %v829 = vpow.pop %v828
    %v830 = vmul.f32 %v774, 1.442695
    %v831 = vpow.pop %v830
    %v832 = vmul.f32 %v775, 1.442695
    %v833 = vpow.pop %v832
    %v834 = vmul.f32 %v776, 1.442695
    %v835 = vpow.pop %v834
    %v836 = vmul.f32 %v777, 1.442695
    %v837 = vpow.pop %v836
    %v838 = vmul.f32 %v778, 1.442695
    %v839 = vpow.pop %v838
    %v840 = vmul.f32 %v779, 1.442695
    %v841 = vpow.pop %v840
    %v842 = vmul.f32 %v780, 1.442695
    %v843 = vpow.pop %v842
    %v844 = vmul.f32 %v781, 1.442695
    %v845 = vpow.pop %v844
    %878 = vset.pattern.permute.xlu0 0
    %879 = vperm.xlu0 %878, %v783
    %v880 = vpop.permute.xlu0 %879
    %881 = vset.pattern.permute.xlu0 0
    %882 = vperm.xlu0 %881, %v785
    %v883 = vpop.permute.xlu0 %882
    %884 = vset.pattern.permute.xlu0 0
    %885 = vperm.xlu0 %884, %v787
    %v886 = vpop.permute.xlu0 %885
    %887 = vset.pattern.permute.xlu0 0
    %888 = vperm.xlu0 %887, %v789
    %v889 = vpop.permute.xlu0 %888
    %890 = vset.pattern.permute.xlu0 0
    %891 = vperm.xlu0 %890, %v791
    %v892 = vpop.permute.xlu0 %891
    %893 = vset.pattern.permute.xlu0 0
    %894 = vperm.xlu0 %893, %v793
    %v895 = vpop.permute.xlu0 %894
    %896 = vset.pattern.permute.xlu0 0
    %897 = vperm.xlu0 %896, %v795
    %v898 = vpop.permute.xlu0 %897
    %899 = vset.pattern.permute.xlu0 0
    %900 = vperm.xlu0 %899, %v797
    %v901 = vpop.permute.xlu0 %900
    %902 = vset.pattern.permute.xlu0 0
    %903 = vperm.xlu0 %902, %v799
    %v904 = vpop.permute.xlu0 %903
    %905 = vset.pattern.permute.xlu0 0
    %906 = vperm.xlu0 %905, %v801
    %v907 = vpop.permute.xlu0 %906
    %908 = vset.pattern.permute.xlu0 0
    %909 = vperm.xlu0 %908, %v803
    %v910 = vpop.permute.xlu0 %909
    %911 = vset.pattern.permute.xlu0 0
    %912 = vperm.xlu0 %911, %v805
    %v913 = vpop.permute.xlu0 %912
    %914 = vset.pattern.permute.xlu0 0
    %915 = vperm.xlu0 %914, %v807
    %v916 = vpop.permute.xlu0 %915
    %917 = vset.pattern.permute.xlu0 0
    %918 = vperm.xlu0 %917, %v809
    %v919 = vpop.permute.xlu0 %918
    %920 = vset.pattern.permute.xlu0 0
    %921 = vperm.xlu0 %920, %v811
    %v922 = vpop.permute.xlu0 %921
    %923 = vset.pattern.permute.xlu0 0
    %924 = vperm.xlu0 %923, %v813
    %v925 = vpop.permute.xlu0 %924
    %926 = vset.pattern.permute.xlu0 0
    %927 = vperm.xlu0 %926, %v815
    %v928 = vpop.permute.xlu0 %927
    %929 = vset.pattern.permute.xlu0 0
    %930 = vperm.xlu0 %929, %v817
    %v931 = vpop.permute.xlu0 %930
    %932 = vset.pattern.permute.xlu0 0
    %933 = vperm.xlu0 %932, %v819
    %v934 = vpop.permute.xlu0 %933
    %935 = vset.pattern.permute.xlu0 0
    %936 = vperm.xlu0 %935, %v821
    %v937 = vpop.permute.xlu0 %936
    %938 = vset.pattern.permute.xlu0 0
    %939 = vperm.xlu0 %938, %v823
    %v940 = vpop.permute.xlu0 %939
    %941 = vset.pattern.permute.xlu0 0
    %942 = vperm.xlu0 %941, %v825
    %v943 = vpop.permute.xlu0 %942
    %944 = vset.pattern.permute.xlu0 0
    %945 = vperm.xlu0 %944, %v827
    %v946 = vpop.permute.xlu0 %945
    %947 = vset.pattern.permute.xlu0 0
    %948 = vperm.xlu0 %947, %v829
    %v949 = vpop.permute.xlu0 %948
    %950 = vset.pattern.permute.xlu0 0
    %951 = vperm.xlu0 %950, %v831
    %v952 = vpop.permute.xlu0 %951
    %953 = vset.pattern.permute.xlu0 0
    %954 = vperm.xlu0 %953, %v833
    %v955 = vpop.permute.xlu0 %954
    %956 = vset.pattern.permute.xlu0 0
    %957 = vperm.xlu0 %956, %v835
    %v958 = vpop.permute.xlu0 %957
    %959 = vset.pattern.permute.xlu0 0
    %960 = vperm.xlu0 %959, %v837
    %v961 = vpop.permute.xlu0 %960
    %962 = vset.pattern.permute.xlu0 0
    %963 = vperm.xlu0 %962, %v839
    %v964 = vpop.permute.xlu0 %963
    %965 = vset.pattern.permute.xlu0 0
    %966 = vperm.xlu0 %965, %v841
    %v967 = vpop.permute.xlu0 %966
    %968 = vset.pattern.permute.xlu0 0
    %969 = vperm.xlu0 %968, %v843
    %v970 = vpop.permute.xlu0 %969
    %971 = vset.pattern.permute.xlu0 0
    %972 = vperm.xlu0 %971, %v845
    %v973 = vpop.permute.xlu0 %972
    %v974 = vlaneseq
    %v975 = vshrl.u32 %v974, 7
    %v976 = vsub.s32 %v532, %v975
    %v977 = vrot.slane %v880, %v976
    %v978 = vlaneseq
    %v979 = vshrl.u32 %v978, 7
    %v980 = vsub.s32 %v537, %v979
    %v981 = vrot.slane %v883, %v980
    %v982 = vsel %vm542, %v981, %v977
    %v983 = vlaneseq
    %v984 = vshrl.u32 %v983, 7
    %v985 = vsub.s32 %v544, %v984
    %v986 = vrot.slane %v886, %v985
    %v987 = vsel %vm549, %v986, %v982
    %v988 = vlaneseq
    %v989 = vshrl.u32 %v988, 7
    %v990 = vsub.s32 %v551, %v989
    %v991 = vrot.slane %v889, %v990
    %v992 = vsel %vm556, %v991, %v987
    %v993 = vlaneseq
    %v994 = vshrl.u32 %v993, 7
    %v995 = vsub.s32 %v532, %v994
    %v996 = vrot.slane %v892, %v995
    %v997 = vlaneseq
    %v998 = vshrl.u32 %v997, 7
    %v999 = vsub.s32 %v537, %v998
    %v1000 = vrot.slane %v895, %v999
    %v1001 = vsel %vm542, %v1000, %v996
    %v1002 = vlaneseq
    %v1003 = vshrl.u32 %v1002, 7
    %v1004 = vsub.s32 %v544, %v1003
    %v1005 = vrot.slane %v898, %v1004
    %v1006 = vsel %vm549, %v1005, %v1001
    %v1007 = vlaneseq
    %v1008 = vshrl.u32 %v1007, 7
    %v1009 = vsub.s32 %v551, %v1008
    %v1010 = vrot.slane %v901, %v1009
    %v1011 = vsel %vm556, %v1010, %v1006
    %v1012 = vlaneseq
    %v1013 = vshrl.u32 %v1012, 7
    %v1014 = vsub.s32 %v532, %v1013
    %v1015 = vrot.slane %v904, %v1014
    %v1016 = vlaneseq
    %v1017 = vshrl.u32 %v1016, 7
    %v1018 = vsub.s32 %v537, %v1017
    %v1019 = vrot.slane %v907, %v1018
    %v1020 = vsel %vm542, %v1019, %v1015
    %v1021 = vlaneseq
    %v1022 = vshrl.u32 %v1021, 7
    %v1023 = vsub.s32 %v544, %v1022
    %v1024 = vrot.slane %v910, %v1023
    %v1025 = vsel %vm549, %v1024, %v1020
    %v1026 = vlaneseq
    %v1027 = vshrl.u32 %v1026, 7
    %v1028 = vsub.s32 %v551, %v1027
    %v1029 = vrot.slane %v913, %v1028
    %v1030 = vsel %vm556, %v1029, %v1025
    %v1031 = vlaneseq
    %v1032 = vshrl.u32 %v1031, 7
    %v1033 = vsub.s32 %v532, %v1032
    %v1034 = vrot.slane %v916, %v1033
    %v1035 = vlaneseq
    %v1036 = vshrl.u32 %v1035, 7
    %v1037 = vsub.s32 %v537, %v1036
    %v1038 = vrot.slane %v919, %v1037
    %v1039 = vsel %vm542, %v1038, %v1034
    %v1040 = vlaneseq
    %v1041 = vshrl.u32 %v1040, 7
    %v1042 = vsub.s32 %v544, %v1041
    %v1043 = vrot.slane %v922, %v1042
    %v1044 = vsel %vm549, %v1043, %v1039
    %v1045 = vlaneseq
    %v1046 = vshrl.u32 %v1045, 7
    %v1047 = vsub.s32 %v551, %v1046
    %v1048 = vrot.slane %v925, %v1047
    %v1049 = vsel %vm556, %v1048, %v1044
    %v1050 = vlaneseq
    %v1051 = vshrl.u32 %v1050, 7
    %v1052 = vsub.s32 %v532, %v1051
    %v1053 = vrot.slane %v928, %v1052
    %v1054 = vlaneseq
    %v1055 = vshrl.u32 %v1054, 7
    %v1056 = vsub.s32 %v537, %v1055
    %v1057 = vrot.slane %v931, %v1056
    %v1058 = vsel %vm542, %v1057, %v1053
    %v1059 = vlaneseq
    %v1060 = vshrl.u32 %v1059, 7
    %v1061 = vsub.s32 %v544, %v1060
    %v1062 = vrot.slane %v934, %v1061
    %v1063 = vsel %vm549, %v1062, %v1058
    %v1064 = vlaneseq
    %v1065 = vshrl.u32 %v1064, 7
    %v1066 = vsub.s32 %v551, %v1065
    %v1067 = vrot.slane %v937, %v1066
    %v1068 = vsel %vm556, %v1067, %v1063
    %v1069 = vlaneseq
    %v1070 = vshrl.u32 %v1069, 7
    %v1071 = vsub.s32 %v532, %v1070
    %v1072 = vrot.slane %v940, %v1071
    %v1073 = vlaneseq
    %v1074 = vshrl.u32 %v1073, 7
    %v1075 = vsub.s32 %v537, %v1074
    %v1076 = vrot.slane %v943, %v1075
    %v1077 = vsel %vm542, %v1076, %v1072
    %v1078 = vlaneseq
    %v1079 = vshrl.u32 %v1078, 7
    %v1080 = vsub.s32 %v544, %v1079
    %v1081 = vrot.slane %v946, %v1080
    %v1082 = vsel %vm549, %v1081, %v1077
    %v1083 = vlaneseq
    %v1084 = vshrl.u32 %v1083, 7
    %v1085 = vsub.s32 %v551, %v1084
    %v1086 = vrot.slane %v949, %v1085
    %v1087 = vsel %vm556, %v1086, %v1082
    %v1088 = vlaneseq
    %v1089 = vshrl.u32 %v1088, 7
    %v1090 = vsub.s32 %v532, %v1089
    %v1091 = vrot.slane %v952, %v1090
    %v1092 = vlaneseq
    %v1093 = vshrl.u32 %v1092, 7
    %v1094 = vsub.s32 %v537, %v1093
    %v1095 = vrot.slane %v955, %v1094
    %v1096 = vsel %vm542, %v1095, %v1091
    %v1097 = vlaneseq
    %v1098 = vshrl.u32 %v1097, 7
    %v1099 = vsub.s32 %v544, %v1098
    %v1100 = vrot.slane %v958, %v1099
    %v1101 = vsel %vm549, %v1100, %v1096
    %v1102 = vlaneseq
    %v1103 = vshrl.u32 %v1102, 7
    %v1104 = vsub.s32 %v551, %v1103
    %v1105 = vrot.slane %v961, %v1104
    %v1106 = vsel %vm556, %v1105, %v1101
    %v1107 = vlaneseq
    %v1108 = vshrl.u32 %v1107, 7
    %v1109 = vsub.s32 %v532, %v1108
    %v1110 = vrot.slane %v964, %v1109
    %v1111 = vlaneseq
    %v1112 = vshrl.u32 %v1111, 7
    %v1113 = vsub.s32 %v537, %v1112
    %v1114 = vrot.slane %v967, %v1113
    %v1115 = vsel %vm542, %v1114, %v1110
    %v1116 = vlaneseq
    %v1117 = vshrl.u32 %v1116, 7
    %v1118 = vsub.s32 %v544, %v1117
    %v1119 = vrot.slane %v970, %v1118
    %v1120 = vsel %vm549, %v1119, %v1115
    %v1121 = vlaneseq
    %v1122 = vshrl.u32 %v1121, 7
    %v1123 = vsub.s32 %v551, %v1122
    %v1124 = vrot.slane %v973, %v1123
    %v1125 = vsel %vm556, %v1124, %v1120
    %v1126 = vsel %vm691, %v1011, %v992
    %v1127 = vsel %vm693, %v1030, %v1126
    %v1128 = vsel %vm695, %v1049, %v1127
    %v1129 = vsel %vm697, %v1068, %v1128
    %v1130 = vsel %vm699, %v1087, %v1129
    %v1131 = vsel %vm701, %v1106, %v1130
    %v1132 = vsel %vm703, %v1125, %v1131
    %v1134 = vsel %vm155, %v1132, 0.0
    %1135 = vadd.xlane.f32.xlu0 %v1134
    %v1136 = vpop.xlane.xlu0 %1135
    %v1137 = vrcp.pop %v1136
    %v1138 = vmul.f32 1.0, %v1137
    %v1140 = vlaneseq
    %v1141 = vshrl.u32 %v1140, 7
    %v1142 = vsub.s32 0, %v1141
    %v1143 = vrot.slane %v1138, %v1142
    %v1144 = vlaneseq
    %v1145 = vshrl.u32 %v1144, 7
    %v1146 = vsub.s32 1, %v1145
    %v1147 = vrot.slane %v1138, %v1146
    %v1148 = vlaneseq
    %v1149 = vshrl.u32 %v1148, 7
    %v1150 = vsub.s32 2, %v1149
    %v1151 = vrot.slane %v1138, %v1150
    %v1152 = vlaneseq
    %v1153 = vshrl.u32 %v1152, 7
    %v1154 = vsub.s32 3, %v1153
    %v1155 = vrot.slane %v1138, %v1154
    %v1156 = vlaneseq
    %v1157 = vshrl.u32 %v1156, 7
    %v1158 = vsub.s32 4, %v1157
    %v1159 = vrot.slane %v1138, %v1158
    %v1160 = vlaneseq
    %v1161 = vshrl.u32 %v1160, 7
    %v1162 = vsub.s32 5, %v1161
    %v1163 = vrot.slane %v1138, %v1162
    %v1164 = vlaneseq
    %v1165 = vshrl.u32 %v1164, 7
    %v1166 = vsub.s32 6, %v1165
    %v1167 = vrot.slane %v1138, %v1166
    %v1168 = vlaneseq
    %v1169 = vshrl.u32 %v1168, 7
    %v1170 = vsub.s32 7, %v1169
    %v1171 = vrot.slane %v1138, %v1170
    %v1180 = vmul.f32 %v783, %v1143
    %v1181 = vmul.f32 %v785, %v1143
    %v1182 = vmul.f32 %v787, %v1143
    %v1183 = vmul.f32 %v789, %v1143
    %v1184 = vmul.f32 %v791, %v1147
    %v1185 = vmul.f32 %v793, %v1147
    %v1186 = vmul.f32 %v795, %v1147
    %v1187 = vmul.f32 %v797, %v1147
    %v1188 = vmul.f32 %v799, %v1151
    %v1189 = vmul.f32 %v801, %v1151
    %v1190 = vmul.f32 %v803, %v1151
    %v1191 = vmul.f32 %v805, %v1151
    %v1192 = vmul.f32 %v807, %v1155
    %v1193 = vmul.f32 %v809, %v1155
    %v1194 = vmul.f32 %v811, %v1155
    %v1195 = vmul.f32 %v813, %v1155
    %v1196 = vmul.f32 %v815, %v1159
    %v1197 = vmul.f32 %v817, %v1159
    %v1198 = vmul.f32 %v819, %v1159
    %v1199 = vmul.f32 %v821, %v1159
    %v1200 = vmul.f32 %v823, %v1163
    %v1201 = vmul.f32 %v825, %v1163
    %v1202 = vmul.f32 %v827, %v1163
    %v1203 = vmul.f32 %v829, %v1163
    %v1204 = vmul.f32 %v831, %v1167
    %v1205 = vmul.f32 %v833, %v1167
    %v1206 = vmul.f32 %v835, %v1167
    %v1207 = vmul.f32 %v837, %v1167
    %v1208 = vmul.f32 %v839, %v1171
    %v1209 = vmul.f32 %v841, %v1171
    %v1210 = vmul.f32 %v843, %v1171
    %v1211 = vmul.f32 %v845, %v1171
    %1244 = vset.pattern.permute.xlu0 0
    %1245 = vperm.xlu0 %1244, %v1180
    %v1246 = vpop.permute.xlu0 %1245
    %1247 = vset.pattern.permute.xlu0 0
    %1248 = vperm.xlu0 %1247, %v1181
    %v1249 = vpop.permute.xlu0 %1248
    %1250 = vset.pattern.permute.xlu0 0
    %1251 = vperm.xlu0 %1250, %v1182
    %v1252 = vpop.permute.xlu0 %1251
    %1253 = vset.pattern.permute.xlu0 0
    %1254 = vperm.xlu0 %1253, %v1183
    %v1255 = vpop.permute.xlu0 %1254
    %1256 = vset.pattern.permute.xlu0 0
    %1257 = vperm.xlu0 %1256, %v1184
    %v1258 = vpop.permute.xlu0 %1257
    %1259 = vset.pattern.permute.xlu0 0
    %1260 = vperm.xlu0 %1259, %v1185
    %v1261 = vpop.permute.xlu0 %1260
    %1262 = vset.pattern.permute.xlu0 0
    %1263 = vperm.xlu0 %1262, %v1186
    %v1264 = vpop.permute.xlu0 %1263
    %1265 = vset.pattern.permute.xlu0 0
    %1266 = vperm.xlu0 %1265, %v1187
    %v1267 = vpop.permute.xlu0 %1266
    %1268 = vset.pattern.permute.xlu0 0
    %1269 = vperm.xlu0 %1268, %v1188
    %v1270 = vpop.permute.xlu0 %1269
    %1271 = vset.pattern.permute.xlu0 0
    %1272 = vperm.xlu0 %1271, %v1189
    %v1273 = vpop.permute.xlu0 %1272
    %1274 = vset.pattern.permute.xlu0 0
    %1275 = vperm.xlu0 %1274, %v1190
    %v1276 = vpop.permute.xlu0 %1275
    %1277 = vset.pattern.permute.xlu0 0
    %1278 = vperm.xlu0 %1277, %v1191
    %v1279 = vpop.permute.xlu0 %1278
    %1280 = vset.pattern.permute.xlu0 0
    %1281 = vperm.xlu0 %1280, %v1192
    %v1282 = vpop.permute.xlu0 %1281
    %1283 = vset.pattern.permute.xlu0 0
    %1284 = vperm.xlu0 %1283, %v1193
    %v1285 = vpop.permute.xlu0 %1284
    %1286 = vset.pattern.permute.xlu0 0
    %1287 = vperm.xlu0 %1286, %v1194
    %v1288 = vpop.permute.xlu0 %1287
    %1289 = vset.pattern.permute.xlu0 0
    %1290 = vperm.xlu0 %1289, %v1195
    %v1291 = vpop.permute.xlu0 %1290
    %1292 = vset.pattern.permute.xlu0 0
    %1293 = vperm.xlu0 %1292, %v1196
    %v1294 = vpop.permute.xlu0 %1293
    %1295 = vset.pattern.permute.xlu0 0
    %1296 = vperm.xlu0 %1295, %v1197
    %v1297 = vpop.permute.xlu0 %1296
    %1298 = vset.pattern.permute.xlu0 0
    %1299 = vperm.xlu0 %1298, %v1198
    %v1300 = vpop.permute.xlu0 %1299
    %1301 = vset.pattern.permute.xlu0 0
    %1302 = vperm.xlu0 %1301, %v1199
    %v1303 = vpop.permute.xlu0 %1302
    %1304 = vset.pattern.permute.xlu0 0
    %1305 = vperm.xlu0 %1304, %v1200
    %v1306 = vpop.permute.xlu0 %1305
    %1307 = vset.pattern.permute.xlu0 0
    %1308 = vperm.xlu0 %1307, %v1201
    %v1309 = vpop.permute.xlu0 %1308
    %1310 = vset.pattern.permute.xlu0 0
    %1311 = vperm.xlu0 %1310, %v1202
    %v1312 = vpop.permute.xlu0 %1311
    %1313 = vset.pattern.permute.xlu0 0
    %1314 = vperm.xlu0 %1313, %v1203
    %v1315 = vpop.permute.xlu0 %1314
    %1316 = vset.pattern.permute.xlu0 0
    %1317 = vperm.xlu0 %1316, %v1204
    %v1318 = vpop.permute.xlu0 %1317
    %1319 = vset.pattern.permute.xlu0 0
    %1320 = vperm.xlu0 %1319, %v1205
    %v1321 = vpop.permute.xlu0 %1320
    %1322 = vset.pattern.permute.xlu0 0
    %1323 = vperm.xlu0 %1322, %v1206
    %v1324 = vpop.permute.xlu0 %1323
    %1325 = vset.pattern.permute.xlu0 0
    %1326 = vperm.xlu0 %1325, %v1207
    %v1327 = vpop.permute.xlu0 %1326
    %1328 = vset.pattern.permute.xlu0 0
    %1329 = vperm.xlu0 %1328, %v1208
    %v1330 = vpop.permute.xlu0 %1329
    %1331 = vset.pattern.permute.xlu0 0
    %1332 = vperm.xlu0 %1331, %v1209
    %v1333 = vpop.permute.xlu0 %1332
    %1334 = vset.pattern.permute.xlu0 0
    %1335 = vperm.xlu0 %1334, %v1210
    %v1336 = vpop.permute.xlu0 %1335
    %1337 = vset.pattern.permute.xlu0 0
    %1338 = vperm.xlu0 %1337, %v1211
    %v1339 = vpop.permute.xlu0 %1338
    %v1340 = vlaneseq
    %v1341 = vshrl.u32 %v1340, 7
    %v1342 = vsub.s32 %v532, %v1341
    %v1343 = vrot.slane %v1246, %v1342
    %v1344 = vlaneseq
    %v1345 = vshrl.u32 %v1344, 7
    %v1346 = vsub.s32 %v537, %v1345
    %v1347 = vrot.slane %v1249, %v1346
    %v1348 = vsel %vm542, %v1347, %v1343
    %v1349 = vlaneseq
    %v1350 = vshrl.u32 %v1349, 7
    %v1351 = vsub.s32 %v544, %v1350
    %v1352 = vrot.slane %v1252, %v1351
    %v1353 = vsel %vm549, %v1352, %v1348
    %v1354 = vlaneseq
    %v1355 = vshrl.u32 %v1354, 7
    %v1356 = vsub.s32 %v551, %v1355
    %v1357 = vrot.slane %v1255, %v1356
    %v1358 = vsel %vm556, %v1357, %v1353
    %v1359 = vlaneseq
    %v1360 = vshrl.u32 %v1359, 7
    %v1361 = vsub.s32 %v532, %v1360
    %v1362 = vrot.slane %v1258, %v1361
    %v1363 = vlaneseq
    %v1364 = vshrl.u32 %v1363, 7
    %v1365 = vsub.s32 %v537, %v1364
    %v1366 = vrot.slane %v1261, %v1365
    %v1367 = vsel %vm542, %v1366, %v1362
    %v1368 = vlaneseq
    %v1369 = vshrl.u32 %v1368, 7
    %v1370 = vsub.s32 %v544, %v1369
    %v1371 = vrot.slane %v1264, %v1370
    %v1372 = vsel %vm549, %v1371, %v1367
    %v1373 = vlaneseq
    %v1374 = vshrl.u32 %v1373, 7
    %v1375 = vsub.s32 %v551, %v1374
    %v1376 = vrot.slane %v1267, %v1375
    %v1377 = vsel %vm556, %v1376, %v1372
    %v1378 = vlaneseq
    %v1379 = vshrl.u32 %v1378, 7
    %v1380 = vsub.s32 %v532, %v1379
    %v1381 = vrot.slane %v1270, %v1380
    %v1382 = vlaneseq
    %v1383 = vshrl.u32 %v1382, 7
    %v1384 = vsub.s32 %v537, %v1383
    %v1385 = vrot.slane %v1273, %v1384
    %v1386 = vsel %vm542, %v1385, %v1381
    %v1387 = vlaneseq
    %v1388 = vshrl.u32 %v1387, 7
    %v1389 = vsub.s32 %v544, %v1388
    %v1390 = vrot.slane %v1276, %v1389
    %v1391 = vsel %vm549, %v1390, %v1386
    %v1392 = vlaneseq
    %v1393 = vshrl.u32 %v1392, 7
    %v1394 = vsub.s32 %v551, %v1393
    %v1395 = vrot.slane %v1279, %v1394
    %v1396 = vsel %vm556, %v1395, %v1391
    %v1397 = vlaneseq
    %v1398 = vshrl.u32 %v1397, 7
    %v1399 = vsub.s32 %v532, %v1398
    %v1400 = vrot.slane %v1282, %v1399
    %v1401 = vlaneseq
    %v1402 = vshrl.u32 %v1401, 7
    %v1403 = vsub.s32 %v537, %v1402
    %v1404 = vrot.slane %v1285, %v1403
    %v1405 = vsel %vm542, %v1404, %v1400
    %v1406 = vlaneseq
    %v1407 = vshrl.u32 %v1406, 7
    %v1408 = vsub.s32 %v544, %v1407
    %v1409 = vrot.slane %v1288, %v1408
    %v1410 = vsel %vm549, %v1409, %v1405
    %v1411 = vlaneseq
    %v1412 = vshrl.u32 %v1411, 7
    %v1413 = vsub.s32 %v551, %v1412
    %v1414 = vrot.slane %v1291, %v1413
    %v1415 = vsel %vm556, %v1414, %v1410
    %v1416 = vlaneseq
    %v1417 = vshrl.u32 %v1416, 7
    %v1418 = vsub.s32 %v532, %v1417
    %v1419 = vrot.slane %v1294, %v1418
    %v1420 = vlaneseq
    %v1421 = vshrl.u32 %v1420, 7
    %v1422 = vsub.s32 %v537, %v1421
    %v1423 = vrot.slane %v1297, %v1422
    %v1424 = vsel %vm542, %v1423, %v1419
    %v1425 = vlaneseq
    %v1426 = vshrl.u32 %v1425, 7
    %v1427 = vsub.s32 %v544, %v1426
    %v1428 = vrot.slane %v1300, %v1427
    %v1429 = vsel %vm549, %v1428, %v1424
    %v1430 = vlaneseq
    %v1431 = vshrl.u32 %v1430, 7
    %v1432 = vsub.s32 %v551, %v1431
    %v1433 = vrot.slane %v1303, %v1432
    %v1434 = vsel %vm556, %v1433, %v1429
    %v1435 = vlaneseq
    %v1436 = vshrl.u32 %v1435, 7
    %v1437 = vsub.s32 %v532, %v1436
    %v1438 = vrot.slane %v1306, %v1437
    %v1439 = vlaneseq
    %v1440 = vshrl.u32 %v1439, 7
    %v1441 = vsub.s32 %v537, %v1440
    %v1442 = vrot.slane %v1309, %v1441
    %v1443 = vsel %vm542, %v1442, %v1438
    %v1444 = vlaneseq
    %v1445 = vshrl.u32 %v1444, 7
    %v1446 = vsub.s32 %v544, %v1445
    %v1447 = vrot.slane %v1312, %v1446
    %v1448 = vsel %vm549, %v1447, %v1443
    %v1449 = vlaneseq
    %v1450 = vshrl.u32 %v1449, 7
    %v1451 = vsub.s32 %v551, %v1450
    %v1452 = vrot.slane %v1315, %v1451
    %v1453 = vsel %vm556, %v1452, %v1448
    %v1454 = vlaneseq
    %v1455 = vshrl.u32 %v1454, 7
    %v1456 = vsub.s32 %v532, %v1455
    %v1457 = vrot.slane %v1318, %v1456
    %v1458 = vlaneseq
    %v1459 = vshrl.u32 %v1458, 7
    %v1460 = vsub.s32 %v537, %v1459
    %v1461 = vrot.slane %v1321, %v1460
    %v1462 = vsel %vm542, %v1461, %v1457
    %v1463 = vlaneseq
    %v1464 = vshrl.u32 %v1463, 7
    %v1465 = vsub.s32 %v544, %v1464
    %v1466 = vrot.slane %v1324, %v1465
    %v1467 = vsel %vm549, %v1466, %v1462
    %v1468 = vlaneseq
    %v1469 = vshrl.u32 %v1468, 7
    %v1470 = vsub.s32 %v551, %v1469
    %v1471 = vrot.slane %v1327, %v1470
    %v1472 = vsel %vm556, %v1471, %v1467
    %v1473 = vlaneseq
    %v1474 = vshrl.u32 %v1473, 7
    %v1475 = vsub.s32 %v532, %v1474
    %v1476 = vrot.slane %v1330, %v1475
    %v1477 = vlaneseq
    %v1478 = vshrl.u32 %v1477, 7
    %v1479 = vsub.s32 %v537, %v1478
    %v1480 = vrot.slane %v1333, %v1479
    %v1481 = vsel %vm542, %v1480, %v1476
    %v1482 = vlaneseq
    %v1483 = vshrl.u32 %v1482, 7
    %v1484 = vsub.s32 %v544, %v1483
    %v1485 = vrot.slane %v1336, %v1484
    %v1486 = vsel %vm549, %v1485, %v1481
    %v1487 = vlaneseq
    %v1488 = vshrl.u32 %v1487, 7
    %v1489 = vsub.s32 %v551, %v1488
    %v1490 = vrot.slane %v1339, %v1489
    %v1491 = vsel %vm556, %v1490, %v1486
    %v1492 = vsel %vm691, %v1377, %v1358
    %v1493 = vsel %vm693, %v1396, %v1492
    %v1494 = vsel %vm695, %v1415, %v1493
    %v1495 = vsel %vm697, %v1434, %v1494
    %v1496 = vsel %vm699, %v1453, %v1495
    %v1497 = vsel %vm701, %v1472, %v1496
    %v1498 = vsel %vm703, %v1491, %v1497
    %1500 = vst.msk [vmem:[#allocation2] sm:$0xff] %vm155, %v1498
    // Predicated region
    $region18: #{tpu_custom_call.1} parent=1 // pred_check
      _
    $region19: #{tpu_custom_call.1} parent=1 // pred_check_branch
      %1502 = sbr.rel (0) target = $region21
    $region20: #{tpu_custom_call.1} parent=1 // pred_region
      %s1504 = ssub.s32 128, 128
      %1505 = vsyncadd [#allocation3], %s1504
      %s1507 = sshll.u32 [#allocation2], 4
      %s1508 = int_to_ptr.vmem [resolvable:$true] %s1507
      %1510 = dma.vmem_to_hbm [thread:$0]  %s1508, 128, %s4, [#allocation3]
    $region21: #{tpu_custom_call.1} parent=1 // pred_fallthru
      _
    // Predicated region
    $region22: #{tpu_custom_call.1} parent=1 // pred_check
      _
    $region23: #{tpu_custom_call.1} parent=1 // pred_check_branch
      %1512 = sbr.rel (0) target = $region25
    $region24: #{tpu_custom_call.1} parent=1 // pred_region
      %1513 = dma.done [#allocation3], 128
    $region25: #{tpu_custom_call.1} parent=1 // pred_fallthru
      _
    %1514 = vsyncpa [#allocation3], 1

</llo_original>
